<compile_context>
chip_gen: v7x
topology: tpu7x:2x2x1
jax: 0.10.0
libtpu: 0.0.40
codegen_flags: <defaults>
</compile_context>

<pallas_src>
import jax
import jax.numpy as jnp
from jax import lax
from jax.experimental import pallas as pl
from jax.experimental.pallas import tpu as pltpu


def _round_up(x, m):
    return (x + m - 1) // m * m


def _pad_to(x, shape):
    pads = [(0, s - d) for d, s in zip(x.shape, shape)]
    if any(p[1] for p in pads):
        return jnp.pad(x, pads)
    return x


def _mlp_readout_kernel(embs_ref, w1_ref, b1_ref, w2_ref, b2_ref, idx_ref,
                        out_ref, g_ref, cnt_ref):
    i = pl.program_id(1)  # row-tile index within this row group (reduction axis)

    @pl.when(i == 0)
    def _init():
        g_ref[...] = jnp.zeros_like(g_ref)
        cnt_ref[...] = jnp.zeros_like(cnt_ref)

    cdt = w1_ref.dtype  # MXU compute dtype (bf16 default, f32 optional)

    # Layer 1: Linear (MXU, f32 accumulation) + bias (f32) + ReLU.
    h = jnp.dot(embs_ref[...], w1_ref[...], preferred_element_type=jnp.float32)
    h = jnp.maximum(h + b1_ref[...], 0.0)

    # Segment-sum in *hidden* space: g += onehot @ h (MXU).  Padded rows carry
    # segment id -1, never match any segment row, and are dropped.
    seg_ids = idx_ref[...]                                              # (1, tile_n)
    rows = lax.broadcasted_iota(
        jnp.int32, (g_ref.shape[0], seg_ids.shape[1]), 0)               # (seg_p, tile_n)
    hit = seg_ids == rows
    g_ref[...] += jnp.dot(hit.astype(cdt), h.astype(cdt),
                          preferred_element_type=jnp.float32)
    # Per-segment row counts (exact, f32) for the layer-2 bias term.
    cnt_ref[...] += jnp.sum(hit.astype(jnp.float32), axis=1, keepdims=True)

    # Epilogue: apply layer 2 once per row group (tiny num_seg_p x hid x out matmul).
    @pl.when(i == pl.num_programs(1) - 1)
    def _finalize():
        out = jnp.dot(g_ref[...].astype(cdt), w2_ref[...],
                      preferred_element_type=jnp.float32)
        out_ref[...] = (out + cnt_ref[...] * b2_ref[...]).astype(out_ref.dtype)


def mlp_readout(embs, batch_idx, w1, b1, w2, b2, num_segments, *,
                tile_n=1024, num_row_groups=None,
                compute_dtype=jnp.bfloat16, single_buffer_weights=True):
    """Pallas TPU MLPReadout: segment_sum(Linear2(relu(Linear1(embs))), batch_idx).

    embs: [N, input_dim] f32.  batch_idx: [N] int32; entries outside
    [0, num_segments) are silently dropped (documented contract, matches
    jnp .at[].add on a [num_segments, ...] output).
    w1: [input_dim, hidden], w2: [hidden, output_dim] (torch nn.Linear weights,
    transposed).  Returns [num_segments, output_dim] f32.
    """
    n, in_dim = embs.shape
    hid = w1.shape[1]
    assert w2.shape[0] == hid, "w1/w2 hidden dims must match"
    out_dim = w2.shape[1]

    # ---- row (N) tiling: full-extent single tile for small N, else 128-aligned ----
    if n <= tile_n:
        tile_n = n
    else:
        tile_n = _round_up(tile_n, 128)
    n_row_tiles_total = pl.cdiv(n, tile_n)

    # Leading *parallel* row-group axis: gives v7x's 2nd TensorCore work; on
    # 1-TC chips (v5e/v6e) it only adds one extra tiny epilogue matmul + an
    # external sum of the per-group slabs (negligible).
    if num_row_groups is None:
        num_row_groups = 2 if n_row_tiles_total >= 2 else 1
    num_row_groups = max(1, min(num_row_groups, n_row_tiles_total))

    n_p = _round_up(n, num_row_groups * tile_n)
    tiles_per_group = n_p // (num_row_groups * tile_n)
    n_pad = n_p - n

    # ---- feature / segment padding: lane-dense output, sublane-aligned segments ----
    hid_p = _round_up(hid, 128)
    out_dim_p = _round_up(out_dim, 128)
    num_seg_p = _round_up(num_segments, 8)

    cdt = jnp.dtype(compute_dtype)
    embs_p = _pad_to(embs.astype(cdt), (n_p, in_dim))
    w1_p = _pad_to(w1.astype(cdt), (in_dim, hid_p))
    b1_p = _pad_to(b1.astype(jnp.float32).reshape(1, -1), (1, hid_p))
    w2_p = _pad_to(w2.astype(cdt), (hid_p, out_dim_p))
    b2_p = _pad_to(b2.astype(jnp.float32).reshape(1, -1), (1, out_dim_p))
    idx = batch_idx.astype(jnp.int32).reshape(1, n)
    if n_pad:
        # padded rows get segment id -1 -> never match any one-hot row -> dropped
        idx = jnp.pad(idx, ((0, 0), (0, n_pad)), constant_values=-1)

    grid = (num_row_groups, tiles_per_group)

    # ---- cost estimate (layer 1 + hidden-space segsum once; layer 2 per group) ----
    flops = (2 * n_p * in_dim * hid_p
             + 2 * num_seg_p * n_p * hid_p
             + 2 * num_row_groups * num_seg_p * hid_p * out_dim_p)
    bytes_accessed = (embs_p.size * cdt.itemsize + idx.size * 4
                      + (w1_p.size + w2_p.size) * cdt.itemsize
                      + (b1_p.size + b2_p.size) * 4
                      + num_row_groups * num_seg_p * out_dim_p * 4)
    cost = pl.CostEstimate(flops=int(flops), transcendentals=0,
                           bytes_accessed=int(bytes_accessed))

    # ---- VMEM budget, clamped to the device (v7x: 64 MiB/TC, v5e/v6e: 128 MiB) ----
    weight_bytes = (in_dim * hid_p * cdt.itemsize + hid_p * 4
                    + hid_p * out_dim_p * cdt.itemsize + out_dim_p * 4)
    weight_bufs = 1 if single_buffer_weights else 2
    vmem_est = (2 * (tile_n * in_dim * cdt.itemsize + tile_n * 4)   # streamed blocks
                + weight_bufs * weight_bytes                        # resident weights
                + 2 * num_seg_p * out_dim_p * 4                     # output block
                + num_seg_p * hid_p * 4 + num_seg_p * 128 * 4       # g, cnt scratch
                + tile_n * hid_p * (4 + cdt.itemsize)               # h (f32 + cast)
                + num_seg_p * tile_n * cdt.itemsize)                # one-hot
    try:
        vmem_cap = int(pltpu.get_tpu_info().vmem_capacity_bytes)
    except Exception:  # pragma: no cover - conservative fallback (v7x size)
        vmem_cap = 64 * 1024 * 1024
    vmem_limit = int(min(int(0.85 * vmem_cap),
                         max(32 * 1024 * 1024, 2 * vmem_est)))

    tpg = tiles_per_group
    const_map = lambda g, i: (0, 0)

    def _call(single_buffer):
        wmode = dict(pipeline_mode=pl.Buffered(1)) if single_buffer else {}
        return pl.pallas_call(
            _mlp_readout_kernel,
            out_shape=jax.ShapeDtypeStruct(
                (num_row_groups, num_seg_p, out_dim_p), jnp.float32),
            grid_spec=pltpu.PrefetchScalarGridSpec(
                num_scalar_prefetch=0,
                grid=grid,
                in_specs=[
                    pl.BlockSpec((tile_n, in_dim),
                                 lambda g, i: (g * tpg + i, 0)),           # embs (streamed)
                    pl.BlockSpec((in_dim, hid_p), const_map, **wmode),     # w1 (resident)
                    pl.BlockSpec((1, hid_p), const_map, **wmode),          # b1 (resident)
                    pl.BlockSpec((hid_p, out_dim_p), const_map, **wmode),  # w2 (resident)
                    pl.BlockSpec((1, out_dim_p), const_map, **wmode),      # b2 (resident)
                    pl.BlockSpec((1, tile_n),
                                 lambda g, i: (0, g * tpg + i)),           # batch_idx
                ],
                out_specs=pl.BlockSpec((None, num_seg_p, out_dim_p),
                                       lambda g, i: (g, 0, 0)),
                scratch_shapes=[
                    pltpu.VMEM((num_seg_p, hid_p), jnp.float32),  # hidden-space accum
                    pltpu.VMEM((num_seg_p, 1), jnp.float32),      # per-segment counts
                ],
            ),
            compiler_params=pltpu.CompilerParams(
                dimension_semantics=("parallel", "arbitrary"),
                vmem_limit_bytes=vmem_limit),
            cost_estimate=cost,
        )(embs_p, w1_p, b1_p, w2_p, b2_p, idx)

    if single_buffer_weights:
        try:
            out_padded = _call(True)
        except Exception:   # fallback if Buffered(1) isn't supported by this jax
            out_padded = _call(False)
    else:
        out_padded = _call(False)

    return out_padded.sum(axis=0)[:num_segments, :out_dim]


def _reference(embs, batch_idx, w1, b1, w2, b2, num_segments):
    hp = lax.Precision.HIGHEST
    h = jnp.maximum(jnp.dot(embs, w1, precision=hp) + b1, 0.0)
    y = jnp.dot(h, w2, precision=hp) + b2
    out = jnp.zeros((num_segments, y.shape[1]), y.dtype)
    return out.at[batch_idx].add(y)


if __name__ == "__main__":
    key = jax.random.PRNGKey(0)
    IN_DIM = 32     # emb_dim of the query-graph nodes
    OUT_DIM = 32    # MLPReadout(emb_dim, emb_dim, scatter_add)
    k1, k2, k3, k4, k5, k6, k7, k8 = jax.random.split(key, 8)

    # PyTorch nn.Linear weights are [out, in]; we store the transposed [in, out].
    w1 = jax.random.normal(k1, (IN_DIM, OUT_DIM), jnp.float32) * 0.1
    b1 = jax.random.normal(k2, (OUT_DIM,), jnp.float32) * 0.1
    w2 = jax.random.normal(k3, (OUT_DIM, OUT_DIM), jnp.float32) * 0.1
    b2 = jax.random.normal(k4, (OUT_DIM,), jnp.float32) * 0.1

    # --- Test 1: tiny graph batch, exact f32 path, single tile / single group ---
    N1, SEG1 = 20, 4
    embs1 = jax.random.normal(k5, (N1, IN_DIM), jnp.float32)
    idx1 = jax.random.randint(k6, (N1,), 0, SEG1, dtype=jnp.int32)
    out1 = jax.block_until_ready(
        mlp_readout(embs1, idx1, w1, b1, w2, b2, SEG1, compute_dtype=jnp.float32))
    ref1 = _reference(embs1, idx1, w1, b1, w2, b2, SEG1)
    assert out1.shape == (SEG1, OUT_DIM)
    assert jnp.allclose(out1, ref1, atol=1e-3, rtol=1e-3), \
        float(jnp.max(jnp.abs(out1 - ref1)))

    # --- Test 2: multi-row-tile accumulator + 2 parallel row groups, f32 exact ---
    N2, SEG2 = 2500, 6
    embs2 = jax.random.normal(k7, (N2, IN_DIM), jnp.float32)
    idx2 = jax.random.randint(k8, (N2,), 0, SEG2, dtype=jnp.int32)
    ref2 = _reference(embs2, idx2, w1, b1, w2, b2, SEG2)
    out2 = jax.block_until_ready(
        mlp_readout(embs2, idx2, w1, b1, w2, b2, SEG2, tile_n=512,
                    num_row_groups=2, compute_dtype=jnp.float32))
    assert out2.shape == (SEG2, OUT_DIM)
    assert jnp.allclose(out2, ref2, atol=5e-2, rtol=1e-2), \
        float(jnp.max(jnp.abs(out2 - ref2)))

    # --- Test 3: same data, default bf16 MXU path (tile_n=1024, auto row groups) ---
    out3 = jax.block_until_ready(
        mlp_readout(embs2, idx2, w1, b1, w2, b2, SEG2))
    assert out3.shape == (SEG2, OUT_DIM)
    rel_err = float(jnp.max(jnp.abs(out3 - ref2)) / (jnp.max(jnp.abs(ref2)) + 1e-6))
    assert rel_err < 2e-2, rel_err

    print("KERNEL_OK")
</pallas_src>

<mosaic_0001>
module attributes {stable_mosaic.version = 11 : i64} {
  func.func @_mlp_readout_kernel(%arg0: i32, %arg1: i32, %arg2: memref<20x32xf32, #tpu.memory_space<vmem>>, %arg3: memref<32x128xf32, #tpu.memory_space<vmem>>, %arg4: memref<1x128xf32, #tpu.memory_space<vmem>>, %arg5: memref<128x128xf32, #tpu.memory_space<vmem>>, %arg6: memref<1x128xf32, #tpu.memory_space<vmem>>, %arg7: memref<1x20xi32, #tpu.memory_space<vmem>>, %arg8: memref<1x8x128xf32, #tpu.memory_space<vmem>>, %arg9: memref<8x128xf32, #tpu.memory_space<vmem>>, %arg10: memref<8x1xf32, #tpu.memory_space<vmem>>) attributes {dimension_semantics = [#tpu.dimension_semantics<parallel>, #tpu.dimension_semantics<arbitrary>], iteration_bounds = array<i64: 1, 1>, scalar_prefetch = 0 : i64, scratch_operands = 2 : i64, tpu.core_type = #tpu.core_type<tc>, window_params = [{transform_indices = @transform_0, window_bounds = array<i64: 20, 32>}, {pipeline_mode = #tpu.pipeline_mode<synchronous>, transform_indices = @transform_1, window_bounds = array<i64: 32, 128>}, {pipeline_mode = #tpu.pipeline_mode<synchronous>, transform_indices = @transform_2, window_bounds = array<i64: 1, 128>}, {pipeline_mode = #tpu.pipeline_mode<synchronous>, transform_indices = @transform_3, window_bounds = array<i64: 128, 128>}, {pipeline_mode = #tpu.pipeline_mode<synchronous>, transform_indices = @transform_4, window_bounds = array<i64: 1, 128>}, {transform_indices = @transform_5, window_bounds = array<i64: 1, 20>}, {transform_indices = @transform_6, window_bounds = array<i64: 1, 8, 128>}]} {
    %c0_i32 = arith.constant 0 : i32
    %0 = arith.cmpi eq, %arg1, %c0_i32 : i32
    %1 = arith.extui %0 : i1 to i32
    %c0_i32_0 = arith.constant 0 : i32
    %2 = arith.cmpi ne, %1, %c0_i32_0 : i32
    scf.if %2 {
      %cst_21 = arith.constant 0.000000e+00 : f32
      %31 = vector.broadcast %cst_21 : f32 to vector<8x128xf32>
      %c0_22 = arith.constant 0 : index
      %c0_23 = arith.constant 0 : index
      %32 = vector.load %arg9[%c0_22, %c0_23] : memref<8x128xf32, #tpu.memory_space<vmem>>, vector<8x128xf32>
      tpu.vector_store %arg9[%c0_22, %c0_23], %31 {strides = array<i32>} : memref<8x128xf32, #tpu.memory_space<vmem>>, vector<8x128xf32>,
      %cst_24 = arith.constant 0.000000e+00 : f32
      %33 = vector.broadcast %cst_24 : f32 to vector<8x1xf32>
      %c0_25 = arith.constant 0 : index
      %c0_26 = arith.constant 0 : index
      %34 = vector.load %arg10[%c0_25, %c0_26] : memref<8x1xf32, #tpu.memory_space<vmem>>, vector<8x1xf32>
      tpu.vector_store %arg10[%c0_25, %c0_26], %33 {strides = array<i32>} : memref<8x1xf32, #tpu.memory_space<vmem>>, vector<8x1xf32>,
    } else {
    }
    %c0 = arith.constant 0 : index
    %c0_1 = arith.constant 0 : index
    %3 = vector.load %arg2[%c0, %c0_1] : memref<20x32xf32, #tpu.memory_space<vmem>>, vector<20x32xf32>
    %c0_2 = arith.constant 0 : index
    %c0_3 = arith.constant 0 : index
    %4 = vector.load %arg3[%c0_2, %c0_3] : memref<32x128xf32, #tpu.memory_space<vmem>>, vector<32x128xf32>
    %cst = arith.constant dense<0.000000e+00> : vector<20x128xf32>
    %5 = tpu.matmul %3, %4, %cst {dimension_numbers = #tpu.dot_dimension_numbers<[1], [0], [0], [1], [0, 0, 1, 1], [], []>} : vector<20x32xf32>, vector<32x128xf32>, vector<20x128xf32> -> vector<20x128xf32>
    %c0_4 = arith.constant 0 : index
    %c0_5 = arith.constant 0 : index
    %6 = vector.load %arg4[%c0_4, %c0_5] : memref<1x128xf32, #tpu.memory_space<vmem>>, vector<1x128xf32>
    %7 = vector.broadcast %6 : vector<1x128xf32> to vector<20x128xf32>
    %8 = arith.addf %5, %7 : vector<20x128xf32>
    %cst_6 = arith.constant 0.000000e+00 : f32
    %9 = vector.broadcast %cst_6 : f32 to vector<20x128xf32>
    %10 = arith.maximumf %8, %9 : vector<20x128xf32>
    %c0_7 = arith.constant 0 : index
    %c0_8 = arith.constant 0 : index
    %11 = vector.load %arg7[%c0_7, %c0_8] : memref<1x20xi32, #tpu.memory_space<vmem>>, vector<1x20xi32>
    %12 = tpu.iota {dimensions = array<i32: 0>} : vector<8x20xi32>
    %13 = vector.broadcast %11 : vector<1x20xi32> to vector<8x20xi32>
    %14 = arith.cmpi eq, %13, %12 : vector<8x20xi32>
    %c0_9 = arith.constant 0 : index
    %c0_10 = arith.constant 0 : index
    %15 = vector.load %arg9[%c0_9, %c0_10] : memref<8x128xf32, #tpu.memory_space<vmem>>, vector<8x128xf32>
    %16 = arith.extui %14 : vector<8x20xi1> to vector<8x20xi32>
    %17 = arith.sitofp %16 : vector<8x20xi32> to vector<8x20xf32>
    %cst_11 = arith.constant dense<0.000000e+00> : vector<8x128xf32>
    %18 = tpu.matmul %17, %10, %cst_11 {dimension_numbers = #tpu.dot_dimension_numbers<[1], [0], [0], [1], [0, 0, 1, 1], [], []>} : vector<8x20xf32>, vector<20x128xf32>, vector<8x128xf32> -> vector<8x128xf32>
    %19 = arith.addf %15, %18 : vector<8x128xf32>
    %c0_12 = arith.constant 0 : index
    %c0_13 = arith.constant 0 : index
    %20 = vector.load %arg9[%c0_12, %c0_13] : memref<8x128xf32, #tpu.memory_space<vmem>>, vector<8x128xf32>
    tpu.vector_store %arg9[%c0_12, %c0_13], %19 {strides = array<i32>} : memref<8x128xf32, #tpu.memory_space<vmem>>, vector<8x128xf32>,
    %c0_14 = arith.constant 0 : index
    %c0_15 = arith.constant 0 : index
    %21 = vector.load %arg10[%c0_14, %c0_15] : memref<8x1xf32, #tpu.memory_space<vmem>>, vector<8x1xf32>
    %22 = arith.extui %14 : vector<8x20xi1> to vector<8x20xi32>
    %23 = arith.sitofp %22 : vector<8x20xi32> to vector<8x20xf32>
    %cst_16 = arith.constant dense<0.000000e+00> : vector<8xf32>
    %24 = vector.multi_reduction <add>, %23, %cst_16 [1] : vector<8x20xf32> to vector<8xf32>
    %25 = vector.shape_cast %24 : vector<8xf32> to vector<8x1xf32>
    %26 = arith.addf %21, %25 : vector<8x1xf32>
    %c0_17 = arith.constant 0 : index
    %c0_18 = arith.constant 0 : index
    %27 = vector.load %arg10[%c0_17, %c0_18] : memref<8x1xf32, #tpu.memory_space<vmem>>, vector<8x1xf32>
    tpu.vector_store %arg10[%c0_17, %c0_18], %26 {strides = array<i32>} : memref<8x1xf32, #tpu.memory_space<vmem>>, vector<8x1xf32>,
    %c0_i32_19 = arith.constant 0 : i32
    %28 = arith.cmpi eq, %arg1, %c0_i32_19 : i32
    %29 = arith.extui %28 : i1 to i32
    %c0_i32_20 = arith.constant 0 : i32
    %30 = arith.cmpi ne, %29, %c0_i32_20 : i32
    scf.if %30 {
      %c0_21 = arith.constant 0 : index
      %c0_22 = arith.constant 0 : index
      %31 = vector.load %arg9[%c0_21, %c0_22] : memref<8x128xf32, #tpu.memory_space<vmem>>, vector<8x128xf32>
      %c0_23 = arith.constant 0 : index
      %c0_24 = arith.constant 0 : index
      %32 = vector.load %arg5[%c0_23, %c0_24] : memref<128x128xf32, #tpu.memory_space<vmem>>, vector<128x128xf32>
      %cst_25 = arith.constant dense<0.000000e+00> : vector<8x128xf32>
      %33 = tpu.matmul %31, %32, %cst_25 {dimension_numbers = #tpu.dot_dimension_numbers<[1], [0], [0], [1], [0, 0, 1, 1], [], []>} : vector<8x128xf32>, vector<128x128xf32>, vector<8x128xf32> -> vector<8x128xf32>
      %c0_26 = arith.constant 0 : index
      %c0_27 = arith.constant 0 : index
      %34 = vector.load %arg10[%c0_26, %c0_27] : memref<8x1xf32, #tpu.memory_space<vmem>>, vector<8x1xf32>
      %c0_28 = arith.constant 0 : index
      %c0_29 = arith.constant 0 : index
      %35 = vector.load %arg6[%c0_28, %c0_29] : memref<1x128xf32, #tpu.memory_space<vmem>>, vector<1x128xf32>
      %36 = vector.broadcast %34 : vector<8x1xf32> to vector<8x128xf32>
      %37 = vector.broadcast %35 : vector<1x128xf32> to vector<8x128xf32>
      %38 = arith.mulf %36, %37 : vector<8x128xf32>
      %39 = arith.addf %33, %38 : vector<8x128xf32>
      %c0_30 = arith.constant 0 : index
      %c0_31 = arith.constant 0 : index
      %c0_32 = arith.constant 0 : index
      %40 = vector.load %arg8[%c0_30, %c0_31, %c0_32] : memref<1x8x128xf32, #tpu.memory_space<vmem>>, vector<1x8x128xf32>
      %41 = vector.shape_cast %40 : vector<1x8x128xf32> to vector<8x128xf32>
      %42 = vector.shape_cast %39 : vector<8x128xf32> to vector<1x8x128xf32>
      tpu.vector_store %arg8[%c0_30, %c0_31, %c0_32], %42 {strides = array<i32>} : memref<1x8x128xf32, #tpu.memory_space<vmem>>, vector<1x8x128xf32>,
    } else {
    }
    return
  }
  func.func @transform_0(%arg0: i32, %arg1: i32) -> (i32, i32) {
    %c1_i32 = arith.constant 1 : i32
    %0 = arith.muli %arg0, %c1_i32 : i32
    %1 = arith.addi %0, %arg1 : i32
    %c0_i32 = arith.constant 0 : i32
    %c0_i32_0 = arith.constant 0 : i32
    return %1, %c0_i32 : i32, i32
  }
  func.func @transform_1(%arg0: i32, %arg1: i32) -> (i32, i32) {
    %c0_i32 = arith.constant 0 : i32
    %c0_i32_0 = arith.constant 0 : i32
    %c0_i32_1 = arith.constant 0 : i32
    return %c0_i32, %c0_i32_0 : i32, i32
  }
  func.func @transform_2(%arg0: i32, %arg1: i32) -> (i32, i32) {
    %c0_i32 = arith.constant 0 : i32
    %c0_i32_0 = arith.constant 0 : i32
    %c0_i32_1 = arith.constant 0 : i32
    return %c0_i32, %c0_i32_0 : i32, i32
  }
  func.func @transform_3(%arg0: i32, %arg1: i32) -> (i32, i32) {
    %c0_i32 = arith.constant 0 : i32
    %c0_i32_0 = arith.constant 0 : i32
    %c0_i32_1 = arith.constant 0 : i32
    return %c0_i32, %c0_i32_0 : i32, i32
  }
  func.func @transform_4(%arg0: i32, %arg1: i32) -> (i32, i32) {
    %c0_i32 = arith.constant 0 : i32
    %c0_i32_0 = arith.constant 0 : i32
    %c0_i32_1 = arith.constant 0 : i32
    return %c0_i32, %c0_i32_0 : i32, i32
  }
  func.func @transform_5(%arg0: i32, %arg1: i32) -> (i32, i32) {
    %c1_i32 = arith.constant 1 : i32
    %0 = arith.muli %arg0, %c1_i32 : i32
    %1 = arith.addi %0, %arg1 : i32
    %c0_i32 = arith.constant 0 : i32
    %c0_i32_0 = arith.constant 0 : i32
    return %c0_i32, %1 : i32, i32
  }
  func.func @transform_6(%arg0: i32, %arg1: i32) -> (i32, i32, i32) {
    %c0_i32 = arith.constant 0 : i32
    %c0_i32_0 = arith.constant 0 : i32
    %c0_i32_1 = arith.constant 0 : i32
    return %arg0, %c0_i32, %c0_i32_0 : i32, i32, i32
  }
}

module attributes {stable_mosaic.version = 11 : i64} {
  func.func @_mlp_readout_kernel(%arg0: i32, %arg1: i32, %arg2: memref<20x32xf32, #tpu.memory_space<vmem>>, %arg3: memref<32x128xf32, #tpu.memory_space<vmem>>, %arg4: memref<1x128xf32, #tpu.memory_space<vmem>>, %arg5: memref<128x128xf32, #tpu.memory_space<vmem>>, %arg6: memref<1x128xf32, #tpu.memory_space<vmem>>, %arg7: memref<1x20xi32, #tpu.memory_space<vmem>>, %arg8: memref<1x8x128xf32, #tpu.memory_space<vmem>>, %arg9: memref<8x128xf32, #tpu.memory_space<vmem>>, %arg10: memref<8x1xf32, #tpu.memory_space<vmem>>) attributes {dimension_semantics = [#tpu.dimension_semantics<parallel>, #tpu.dimension_semantics<arbitrary>], iteration_bounds = array<i64: 1, 1>, scalar_prefetch = 0 : i64, scratch_operands = 2 : i64, tpu.core_type = #tpu.core_type<tc>, window_params = [{transform_indices = @transform_0, window_bounds = array<i64: 20, 32>}, {pipeline_mode = #tpu.pipeline_mode<synchronous>, transform_indices = @transform_1, window_bounds = array<i64: 32, 128>}, {pipeline_mode = #tpu.pipeline_mode<synchronous>, transform_indices = @transform_2, window_bounds = array<i64: 1, 128>}, {pipeline_mode = #tpu.pipeline_mode<synchronous>, transform_indices = @transform_3, window_bounds = array<i64: 128, 128>}, {pipeline_mode = #tpu.pipeline_mode<synchronous>, transform_indices = @transform_4, window_bounds = array<i64: 1, 128>}, {transform_indices = @transform_5, window_bounds = array<i64: 1, 20>}, {transform_indices = @transform_6, window_bounds = array<i64: 1, 8, 128>}]} {
    %c0_i32 = arith.constant 0 : i32
    %0 = arith.cmpi eq, %arg1, %c0_i32 : i32
    %1 = arith.extui %0 : i1 to i32
    %c0_i32_0 = arith.constant 0 : i32
    %2 = arith.cmpi ne, %1, %c0_i32_0 : i32
    scf.if %2 {
      %cst_21 = arith.constant 0.000000e+00 : f32
      %31 = vector.broadcast %cst_21 : f32 to vector<8x128xf32>
      %c0_22 = arith.constant 0 : index
      %c0_23 = arith.constant 0 : index
      %32 = vector.load %arg9[%c0_22, %c0_23] : memref<8x128xf32, #tpu.memory_space<vmem>>, vector<8x128xf32>
      tpu.vector_store %arg9[%c0_22, %c0_23], %31 {strides = array<i32>} : memref<8x128xf32, #tpu.memory_space<vmem>>, vector<8x128xf32>,
      %cst_24 = arith.constant 0.000000e+00 : f32
      %33 = vector.broadcast %cst_24 : f32 to vector<8x1xf32>
      %c0_25 = arith.constant 0 : index
      %c0_26 = arith.constant 0 : index
      %34 = vector.load %arg10[%c0_25, %c0_26] : memref<8x1xf32, #tpu.memory_space<vmem>>, vector<8x1xf32>
      tpu.vector_store %arg10[%c0_25, %c0_26], %33 {strides = array<i32>} : memref<8x1xf32, #tpu.memory_space<vmem>>, vector<8x1xf32>,
    } else {
    }
    %c0 = arith.constant 0 : index
    %c0_1 = arith.constant 0 : index
    %3 = vector.load %arg2[%c0, %c0_1] : memref<20x32xf32, #tpu.memory_space<vmem>>, vector<20x32xf32>
    %c0_2 = arith.constant 0 : index
    %c0_3 = arith.constant 0 : index
    %4 = vector.load %arg3[%c0_2, %c0_3] : memref<32x128xf32, #tpu.memory_space<vmem>>, vector<32x128xf32>
    %cst = arith.constant dense<0.000000e+00> : vector<20x128xf32>
    %5 = tpu.matmul %3, %4, %cst {dimension_numbers = #tpu.dot_dimension_numbers<[1], [0], [0], [1], [0, 0, 1, 1], [], []>} : vector<20x32xf32>, vector<32x128xf32>, vector<20x128xf32> -> vector<20x128xf32>
    %c0_4 = arith.constant 0 : index
    %c0_5 = arith.constant 0 : index
    %6 = vector.load %arg4[%c0_4, %c0_5] : memref<1x128xf32, #tpu.memory_space<vmem>>, vector<1x128xf32>
    %7 = vector.broadcast %6 : vector<1x128xf32> to vector<20x128xf32>
    %8 = arith.addf %5, %7 : vector<20x128xf32>
    %cst_6 = arith.constant 0.000000e+00 : f32
    %9 = vector.broadcast %cst_6 : f32 to vector<20x128xf32>
    %10 = arith.maximumf %8, %9 : vector<20x128xf32>
    %c0_7 = arith.constant 0 : index
    %c0_8 = arith.constant 0 : index
    %11 = vector.load %arg7[%c0_7, %c0_8] : memref<1x20xi32, #tpu.memory_space<vmem>>, vector<1x20xi32>
    %12 = tpu.iota {dimensions = array<i32: 0>} : vector<8x20xi32>
    %13 = vector.broadcast %11 : vector<1x20xi32> to vector<8x20xi32>
    %14 = arith.cmpi eq, %13, %12 : vector<8x20xi32>
    %c0_9 = arith.constant 0 : index
    %c0_10 = arith.constant 0 : index
    %15 = vector.load %arg9[%c0_9, %c0_10] : memref<8x128xf32, #tpu.memory_space<vmem>>, vector<8x128xf32>
    %16 = arith.extui %14 : vector<8x20xi1> to vector<8x20xi32>
    %17 = arith.sitofp %16 : vector<8x20xi32> to vector<8x20xf32>
    %cst_11 = arith.constant dense<0.000000e+00> : vector<8x128xf32>
    %18 = tpu.matmul %17, %10, %cst_11 {dimension_numbers = #tpu.dot_dimension_numbers<[1], [0], [0], [1], [0, 0, 1, 1], [], []>} : vector<8x20xf32>, vector<20x128xf32>, vector<8x128xf32> -> vector<8x128xf32>
    %19 = arith.addf %15, %18 : vector<8x128xf32>
    %c0_12 = arith.constant 0 : index
    %c0_13 = arith.constant 0 : index
    %20 = vector.load %arg9[%c0_12, %c0_13] : memref<8x128xf32, #tpu.memory_space<vmem>>, vector<8x128xf32>
    tpu.vector_store %arg9[%c0_12, %c0_13], %19 {strides = array<i32>} : memref<8x128xf32, #tpu.memory_space<vmem>>, vector<8x128xf32>,
    %c0_14 = arith.constant 0 : index
    %c0_15 = arith.constant 0 : index
    %21 = vector.load %arg10[%c0_14, %c0_15] : memref<8x1xf32, #tpu.memory_space<vmem>>, vector<8x1xf32>
    %22 = arith.extui %14 : vector<8x20xi1> to vector<8x20xi32>
    %23 = arith.sitofp %22 : vector<8x20xi32> to vector<8x20xf32>
    %cst_16 = arith.constant dense<0.000000e+00> : vector<8xf32>
    %24 = vector.multi_reduction <add>, %23, %cst_16 [1] : vector<8x20xf32> to vector<8xf32>
    %25 = vector.shape_cast %24 : vector<8xf32> to vector<8x1xf32>
    %26 = arith.addf %21, %25 : vector<8x1xf32>
    %c0_17 = arith.constant 0 : index
    %c0_18 = arith.constant 0 : index
    %27 = vector.load %arg10[%c0_17, %c0_18] : memref<8x1xf32, #tpu.memory_space<vmem>>, vector<8x1xf32>
    tpu.vector_store %arg10[%c0_17, %c0_18], %26 {strides = array<i32>} : memref<8x1xf32, #tpu.memory_space<vmem>>, vector<8x1xf32>,
    %c0_i32_19 = arith.constant 0 : i32
    %28 = arith.cmpi eq, %arg1, %c0_i32_19 : i32
    %29 = arith.extui %28 : i1 to i32
    %c0_i32_20 = arith.constant 0 : i32
    %30 = arith.cmpi ne, %29, %c0_i32_20 : i32
    scf.if %30 {
      %c0_21 = arith.constant 0 : index
      %c0_22 = arith.constant 0 : index
      %31 = vector.load %arg9[%c0_21, %c0_22] : memref<8x128xf32, #tpu.memory_space<vmem>>, vector<8x128xf32>
      %c0_23 = arith.constant 0 : index
      %c0_24 = arith.constant 0 : index
      %32 = vector.load %arg5[%c0_23, %c0_24] : memref<128x128xf32, #tpu.memory_space<vmem>>, vector<128x128xf32>
      %cst_25 = arith.constant dense<0.000000e+00> : vector<8x128xf32>
      %33 = tpu.matmul %31, %32, %cst_25 {dimension_numbers = #tpu.dot_dimension_numbers<[1], [0], [0], [1], [0, 0, 1, 1], [], []>} : vector<8x128xf32>, vector<128x128xf32>, vector<8x128xf32> -> vector<8x128xf32>
      %c0_26 = arith.constant 0 : index
      %c0_27 = arith.constant 0 : index
      %34 = vector.load %arg10[%c0_26, %c0_27] : memref<8x1xf32, #tpu.memory_space<vmem>>, vector<8x1xf32>
      %c0_28 = arith.constant 0 : index
      %c0_29 = arith.constant 0 : index
      %35 = vector.load %arg6[%c0_28, %c0_29] : memref<1x128xf32, #tpu.memory_space<vmem>>, vector<1x128xf32>
      %36 = vector.broadcast %34 : vector<8x1xf32> to vector<8x128xf32>
      %37 = vector.broadcast %35 : vector<1x128xf32> to vector<8x128xf32>
      %38 = arith.mulf %36, %37 : vector<8x128xf32>
      %39 = arith.addf %33, %38 : vector<8x128xf32>
      %c0_30 = arith.constant 0 : index
      %c0_31 = arith.constant 0 : index
      %c0_32 = arith.constant 0 : index
      %40 = vector.load %arg8[%c0_30, %c0_31, %c0_32] : memref<1x8x128xf32, #tpu.memory_space<vmem>>, vector<1x8x128xf32>
      %41 = vector.shape_cast %40 : vector<1x8x128xf32> to vector<8x128xf32>
      %42 = vector.shape_cast %39 : vector<8x128xf32> to vector<1x8x128xf32>
      tpu.vector_store %arg8[%c0_30, %c0_31, %c0_32], %42 {strides = array<i32>} : memref<1x8x128xf32, #tpu.memory_space<vmem>>, vector<1x8x128xf32>,
    } else {
    }
    return
  }
  func.func @transform_0(%arg0: i32, %arg1: i32) -> (i32, i32) {
    %c1_i32 = arith.constant 1 : i32
    %0 = arith.muli %arg0, %c1_i32 : i32
    %1 = arith.addi %0, %arg1 : i32
    %c0_i32 = arith.constant 0 : i32
    %c0_i32_0 = arith.constant 0 : i32
    return %1, %c0_i32 : i32, i32
  }
  func.func @transform_1(%arg0: i32, %arg1: i32) -> (i32, i32) {
    %c0_i32 = arith.constant 0 : i32
    %c0_i32_0 = arith.constant 0 : i32
    %c0_i32_1 = arith.constant 0 : i32
    return %c0_i32, %c0_i32_0 : i32, i32
  }
  func.func @transform_2(%arg0: i32, %arg1: i32) -> (i32, i32) {
    %c0_i32 = arith.constant 0 : i32
    %c0_i32_0 = arith.constant 0 : i32
    %c0_i32_1 = arith.constant 0 : i32
    return %c0_i32, %c0_i32_0 : i32, i32
  }
  func.func @transform_3(%arg0: i32, %arg1: i32) -> (i32, i32) {
    %c0_i32 = arith.constant 0 : i32
    %c0_i32_0 = arith.constant 0 : i32
    %c0_i32_1 = arith.constant 0 : i32
    return %c0_i32, %c0_i32_0 : i32, i32
  }
  func.func @transform_4(%arg0: i32, %arg1: i32) -> (i32, i32) {
    %c0_i32 = arith.constant 0 : i32
    %c0_i32_0 = arith.constant 0 : i32
    %c0_i32_1 = arith.constant 0 : i32
    return %c0_i32, %c0_i32_0 : i32, i32
  }
  func.func @transform_5(%arg0: i32, %arg1: i32) -> (i32, i32) {
    %c1_i32 = arith.constant 1 : i32
    %0 = arith.muli %arg0, %c1_i32 : i32
    %1 = arith.addi %0, %arg1 : i32
    %c0_i32 = arith.constant 0 : i32
    %c0_i32_0 = arith.constant 0 : i32
    return %c0_i32, %1 : i32, i32
  }
  func.func @transform_6(%arg0: i32, %arg1: i32) -> (i32, i32, i32) {
    %c0_i32 = arith.constant 0 : i32
    %c0_i32_0 = arith.constant 0 : i32
    %c0_i32_1 = arith.constant 0 : i32
    return %arg0, %c0_i32, %c0_i32_0 : i32, i32, i32
  }
}

</mosaic_0001>

<llo_original>
// kernel: tpu_custom_call.1
$region0: #{tpu_custom_call.1}
  #allocation0 [shape = 'u32[]', space=smem, size = 0x4, offset = 0x4, fixed_abs, tag = 'smem constant byte address 0x4 - core index']
  #allocation1 [shape = 'u32[144,128]{1,0:T(1,128)}', space=vmem, size = 0x12000, scoped, tag = 'internal scratch']
  #allocation2 [shape = 'f32[8,128]{1,0:T(8,128)}', space=vmem, size = 0x1000, scoped, tag = 'scratch operand']
  #allocation3 [shape = 'f32[8,1]{1,0:T(8,128)}', space=vmem, size = 0x1000, scoped, tag = 'scratch operand']
  %s0 = inlined_call_operand.hbm [shape: f32[20,32], index: 0, kind: input, shape index: {}]
  %s1 = inlined_call_operand.hbm [shape: f32[32,128], index: 1, kind: input, shape index: {}]
  %s2 = inlined_call_operand.vmem [shape: f32[1,128], index: 2, kind: input, shape index: {}]
  %s3 = inlined_call_operand.hbm [shape: f32[128,128], index: 3, kind: input, shape index: {}]
  %s4 = inlined_call_operand.vmem [shape: f32[1,128], index: 4, kind: input, shape index: {}]
  %s5 = inlined_call_operand.vmem [shape: s32[1,20], index: 5, kind: input, shape index: {}]
  %s6 = inlined_call_operand.hbm [shape: f32[1,8,128], index: 6, kind: output, shape index: {}]
  %s7 = sld [smem:[#allocation0]]
  $region54: #{tpu_custom_call.1} parent=0
    _
  %s9 = ssub.s32 1, %s7
  %s10 = scalar_select 0, %s9, %s7
  $region1: #{tpu_custom_call.1} parent=0
    #allocation4 [shape = 'u8[12288]{0}', space=vmem, size = 0x3000, scoped, tag = 'input window, operand 0, single buffered']
    #allocation5 [shape = 's32[1]{0}', space=sflag, size = 0x4, scoped, tag = 'scoped memory for tpu_custom_call.1']
    #allocation6 [shape = 's32[1]{0}', space=sflag, size = 0x4, scoped, tag = 'scoped memory for tpu_custom_call.1']
    #allocation7 [shape = 'u8[16384]{0}', space=vmem, size = 0x4000, scoped, tag = 'input window, operand 1, single buffered']
    #allocation8 [shape = 's32[1]{0}', space=sflag, size = 0x4, scoped, tag = 'scoped memory for tpu_custom_call.1']
    #allocation9 [shape = 'u8[65536]{0}', space=vmem, size = 0x10000, scoped, tag = 'input window, operand 3, single buffered']
    #allocation10 [shape = 'u8[4096]{0}', space=vmem, size = 0x1000, scoped, tag = 'output window, operand 0, single buffered']
    %11 = vsyncpa [#allocation5], 0
    %12 = vsyncpa [#allocation8], 0
    %13 = vsyncpa [#allocation6], 0
    // Predicated region
    $region2: #{tpu_custom_call.1} parent=1 // pred_check
      _
    $region3: #{tpu_custom_call.1} parent=1 // pred_check_branch
      %15 = sbr.rel (0) target = $region5
    $region4: #{tpu_custom_call.1} parent=1 // pred_region
      %s16 = sadd.s32 0, 0
      %s17 = smul.u32 3, %s16
      %s19 = ssub.s32 384, 384
      %20 = vsyncadd [#allocation5], %s19
      %s21 = smul.addr %s17, 128
      %s22 = scalar_lea.hbm %s0, %s21
      %s23 = sshll.u32 [#allocation4], 4
      %s24 = int_to_ptr.vmem [resolvable:$true] %s23
      %29 = dma.hbm_to_vmem [thread:$0]  %s22, 384, %s24, [#allocation5], 128, 128, 8
    $region5: #{tpu_custom_call.1} parent=1 // pred_fallthru
      _
    // Predicated region
    $region6: #{tpu_custom_call.1} parent=1 // pred_check
      _
    $region7: #{tpu_custom_call.1} parent=1 // pred_check_branch
      %31 = sbr.rel (0) target = $region9
    $region8: #{tpu_custom_call.1} parent=1 // pred_region
      %s33 = ssub.s32 512, 512
      %34 = vsyncadd [#allocation8], %s33
      %s35 = sshll.u32 [#allocation7], 4
      %s36 = int_to_ptr.vmem [resolvable:$true] %s35
      %41 = dma.hbm_to_vmem [thread:$0]  %s1, 512, %s36, [#allocation8], 128, 128, 8
    $region9: #{tpu_custom_call.1} parent=1 // pred_fallthru
      _
    // Predicated region
    $region10: #{tpu_custom_call.1} parent=1 // pred_check
      _
    $region11: #{tpu_custom_call.1} parent=1 // pred_check_branch
      %43 = sbr.rel (0) target = $region13
    $region12: #{tpu_custom_call.1} parent=1 // pred_region
      _
    $region13: #{tpu_custom_call.1} parent=1 // pred_fallthru
      _
    // Predicated region
    $region14: #{tpu_custom_call.1} parent=1 // pred_check
      _
    $region15: #{tpu_custom_call.1} parent=1 // pred_check_branch
      %45 = sbr.rel (0) target = $region17
    $region16: #{tpu_custom_call.1} parent=1 // pred_region
      %s47 = ssub.s32 2048, 2048
      %48 = vsyncadd [#allocation8], %s47
      %s49 = sshll.u32 [#allocation9], 4
      %s50 = int_to_ptr.vmem [resolvable:$true] %s49
      %55 = dma.hbm_to_vmem [thread:$0]  %s3, 2048, %s50, [#allocation8], 128, 128, 8
    $region17: #{tpu_custom_call.1} parent=1 // pred_fallthru
      _
    // Predicated region
    $region18: #{tpu_custom_call.1} parent=1 // pred_check
      _
    $region19: #{tpu_custom_call.1} parent=1 // pred_check_branch
      %57 = sbr.rel (0) target = $region21
    $region20: #{tpu_custom_call.1} parent=1 // pred_region
      _
    $region21: #{tpu_custom_call.1} parent=1 // pred_fallthru
      _
    // Predicated region
    $region22: #{tpu_custom_call.1} parent=1 // pred_check
      _
    $region23: #{tpu_custom_call.1} parent=1 // pred_check_branch
      %59 = sbr.rel (0) target = $region25
    $region24: #{tpu_custom_call.1} parent=1 // pred_region
      %s60 = sadd.s32 0, 0
      %p61 = scmp.lt.s32.totalorder %s60, 0
      %s62 = scalar_select %p61, %s60, 0
      %s63 = scalar_lea.vmem %s5, %s62
      %s64 = sadd.s32 0, 0
    $region25: #{tpu_custom_call.1} parent=1 // pred_fallthru
      _
    // Predicated region
    $region26: #{tpu_custom_call.1} parent=1 // pred_check
      _
    $region27: #{tpu_custom_call.1} parent=1 // pred_check_branch
      %66 = sbr.rel (0) target = $region29
    $region28: #{tpu_custom_call.1} parent=1 // pred_region
      %67 = dma.done [#allocation5], 384
    $region29: #{tpu_custom_call.1} parent=1 // pred_fallthru
      _
    // Predicated region
    $region30: #{tpu_custom_call.1} parent=1 // pred_check
      _
    $region31: #{tpu_custom_call.1} parent=1 // pred_check_branch
      %69 = sbr.rel (0) target = $region33
    $region32: #{tpu_custom_call.1} parent=1 // pred_region
      %70 = dma.done [#allocation8], 512
    $region33: #{tpu_custom_call.1} parent=1 // pred_fallthru
      _
    // Predicated region
    $region34: #{tpu_custom_call.1} parent=1 // pred_check
      _
    $region35: #{tpu_custom_call.1} parent=1 // pred_check_branch
      %72 = sbr.rel (0) target = $region37
    $region36: #{tpu_custom_call.1} parent=1 // pred_region
      %73 = dma.done [#allocation8], 2048
    $region37: #{tpu_custom_call.1} parent=1 // pred_fallthru
      _
    %s74 = sadd.s32 0, 0
    %p75 = scmp.lt.s32.totalorder %s74, 0
    %s76 = scalar_select %p75, %s74, 0
    %s77 = scalar_lea.vmem %s5, %s76
    %s78 = sadd.s32 0, 0
    %s79 = smul.u32 3, %s78
    %s80 = sadd.s32 0, 0
    %p81 = scmp.lt.s32.totalorder %s80, 0
    %s82 = scalar_select %p81, %s80, 0
    %s83 = scalar_lea.vmem %s5, %s82
    %s84 = sadd.s32 0, 0
    %p85 = scmp.eq.s32.totalorder 0, 0
    // Predicated region
    $region38: #{tpu_custom_call.1} parent=1 // pred_check
      %p86 = pneg %p85
    $region39: #{tpu_custom_call.1} parent=1 // pred_check_branch
      %88 = sbr.rel (%p86) target = $region41
    $region40: #{tpu_custom_call.1} parent=1 // pred_region
      %89 = vst [vmem:[#allocation2] sm:$0xff] 0.0
      %vm90 = vcmask 7168
      %91 = vst.msk [vmem:[#allocation3] sm:$0xff] %vm90, 0.0
    $region41: #{tpu_custom_call.1} parent=1 // pred_fallthru
      _
    %v92 = vld [vmem:[#allocation4] sm:$0xff]
    %v93 = vld [vmem:[#allocation4 + $0x8] sm:$0xff]
    %v94 = vld [vmem:[#allocation4 + $0x10] sm:$0xf]
    %v95 = vld [vmem:[#allocation7] sm:$0xff]
    %v96 = vld [vmem:[#allocation7 + $0x8] sm:$0xff]
    %v97 = vld [vmem:[#allocation7 + $0x10] sm:$0xff]
    %v98 = vld [vmem:[#allocation7 + $0x18] sm:$0xff]
    %v99 = vld [vmem:[%s2] sm:$0x1]
    %v101 = vlaneseq
    %v102 = vshrl.u32 %v101, 7
    %v103 = vsub.s32 0, %v102
    %v104 = vrot.slane %v99, %v103
    %vm106 = vcmask 261120
    %v108 = vsel %vm106, %v92, 0
    %v111 = vsel %vm106, %v93, 0
    %v114 = vsel %vm106, %v94, 0
    %116 = vmatprep.subr.mxu0 0.0
    %117 = vmatpush1.msra.mxu0 %v95
    %118 = vmatprep.subr.mxu0 0.0
    %119 = vmatpush1.msra.mxu0 %v96
    %120 = vmatprep.subr.mxu0 0.0
    %121 = vmatpush1.msra.mxu0 %v97
    %122 = vmatprep.subr.mxu0 0.0
    %123 = vmatpush1.msra.mxu0 %v98
    %124 = vmatprep.subr.mxu0 0.0
    %125 = vmatpush1.msra.mxu0 0.0
    %126 = vmatprep.subr.mxu0 0.0
    %127 = vmatpush1.msra.mxu0 0.0
    %128 = vmatprep.subr.mxu0 0.0
    %129 = vmatpush1.msra.mxu0 0.0
    %130 = vmatprep.subr.mxu0 0.0
    %131 = vmatpush1.msra.mxu0 0.0
    %132 = vmatprep.subr.mxu0 0.0
    %133 = vmatpush1.msra.mxu0 0.0
    %134 = vmatprep.subr.mxu0 0.0
    %135 = vmatpush1.msra.mxu0 0.0
    %136 = vmatprep.subr.mxu0 0.0
    %137 = vmatpush1.msra.mxu0 0.0
    %138 = vmatprep.subr.mxu0 0.0
    %139 = vmatpush1.msra.mxu0 0.0
    %140 = vmatprep.subr.mxu0 0.0
    %141 = vmatpush1.msra.mxu0 0.0
    %142 = vmatprep.subr.mxu0 0.0
    %143 = vmatpush1.msra.mxu0 0.0
    %144 = vmatprep.subr.mxu0 0.0
    %145 = vmatpush1.msra.mxu0 0.0
    %146 = vmatprep.subr.mxu0 0.0
    %147 = vmatpush1.msra.mxu0 0.0
    %148 = vmatprep.subr.mxu0 0.0
    %149 = vmatpush1.msra.mxu0 0.0
    %150 = vmatprep.subr.mxu0 0.0
    %151 = vmatpush1.msra.mxu0 0.0
    %152 = vmatprep.subr.mxu0 0.0
    %153 = vmatpush1.msra.mxu0 0.0
    %154 = vmatprep.subr.mxu0 0.0
    %155 = vmatpush1.msra.mxu0 0.0
    %156 = vmatprep.subr.mxu0 0.0
    %157 = vmatpush1.msra.mxu0 0.0
    %158 = vmatprep.subr.mxu0 0.0
    %159 = vmatpush1.msra.mxu0 0.0
    %160 = vmatprep.subr.mxu0 0.0
    %161 = vmatpush1.msra.mxu0 0.0
    %162 = vmatprep.subr.mxu0 0.0
    %163 = vmatpush1.msra.mxu0 0.0
    %164 = vmatprep.subr.mxu0 0.0
    %165 = vmatpush1.msra.mxu0 0.0
    %166 = vmatprep.subr.mxu0 0.0
    %167 = vmatpush1.msra.mxu0 0.0
    %168 = vmatprep.subr.mxu0 0.0
    %169 = vmatpush1.msra.mxu0 0.0
    %170 = vmatprep.subr.mxu0 0.0
    %171 = vmatpush1.msra.mxu0 0.0
    %172 = vmatprep.subr.mxu0 0.0
    %173 = vmatpush1.msra.mxu0 0.0
    %174 = vmatprep.subr.mxu0 0.0
    %175 = vmatpush1.msra.mxu0 0.0
    %176 = vmatprep.subr.mxu0 0.0
    %177 = vmatpush1.msra.mxu0 0.0
    %178 = vmatprep.subr.mxu0 0.0
    %179 = vmatpush1.msra.mxu0 0.0
    %180 = vmatprep.mubr.f32.mxu0 0.0
    %181 = vmatmul.mubr.f32.gmra.mrb[0].mxu0 %v108
    %v182 = vpop.f32.mrb[0].mxu0
    %v183 = vadd.f32 %v104, %v182
    %v184 = vpop.f32.mrb[0].mxu0
    %185 = vmatprep.mubr.f32.mxu0 0.0
    %186 = vmatmul.mubr.f32.gmra.mrb[0].mxu0 %v111
    %v187 = vpop.f32.mrb[0].mxu0
    %v188 = vadd.f32 %v104, %v187
    %v189 = vpop.f32.mrb[0].mxu0
    %190 = vmatprep.mubr.f32.mxu0 0.0
    %191 = vmatmul.mubr.f32.gmra.mrb[0].mxu0 %v114
    %v192 = vpop.f32.mrb[0].mxu0
    %v193 = vadd.f32 %v104, %v192
    %v194 = vpop.f32.mrb[0].mxu0
    %195 = vdwg.mxu0
    %v196 = vmax.f32 %v183, 0.0
    %v197 = vmax.f32 %v188, 0.0
    %v198 = vmax.f32 %v193, 0.0
    %v199 = vld [vmem:[%s83] sm:$0x1]
    %v200 = vlaneseq
    %v201 = vshrl.u32 %v200, 7
    %v202 = vlaneseq
    %v203 = vshrl.u32 %v202, 7
    %v204 = vsub.s32 0, %v203
    %v205 = vrot.slane %v199, %v204
    %vm206 = vcmp.eq.s32.totalorder %v205, %v201
    %v207 = vld [vmem:[#allocation2] sm:$0xff]
    %v208 = vsel %vm206, 1, 0
    %v209 = vcvt.s32.f32 %v208
    %vm210 = vcmask 162816
    %v212 = vsel %vm210, %v209, 0
    %vm214 = vcmask 1043456
    %v216 = vsel %vm214, %v198, 0
    %218 = vmatprep.subr.mxu0 0.0
    %219 = vmatpush1.msra.mxu0 %v196
    %220 = vmatprep.subr.mxu0 0.0
    %221 = vmatpush1.msra.mxu0 %v197
    %222 = vmatprep.subr.mxu0 0.0
    %223 = vmatpush1.msra.mxu0 %v216
    %224 = vmatprep.subr.mxu0 0.0
    %225 = vmatpush1.msra.mxu0 0.0
    %226 = vmatprep.subr.mxu0 0.0
    %227 = vmatpush1.msra.mxu0 0.0
    %228 = vmatprep.subr.mxu0 0.0
    %229 = vmatpush1.msra.mxu0 0.0
    %230 = vmatprep.subr.mxu0 0.0
    %231 = vmatpush1.msra.mxu0 0.0
    %232 = vmatprep.subr.mxu0 0.0
    %233 = vmatpush1.msra.mxu0 0.0
    %234 = vmatprep.subr.mxu0 0.0
    %235 = vmatpush1.msra.mxu0 0.0
    %236 = vmatprep.subr.mxu0 0.0
    %237 = vmatpush1.msra.mxu0 0.0
    %238 = vmatprep.subr.mxu0 0.0
    %239 = vmatpush1.msra.mxu0 0.0
    %240 = vmatprep.subr.mxu0 0.0
    %241 = vmatpush1.msra.mxu0 0.0
    %242 = vmatprep.subr.mxu0 0.0
    %243 = vmatpush1.msra.mxu0 0.0
    %244 = vmatprep.subr.mxu0 0.0
    %245 = vmatpush1.msra.mxu0 0.0
    %246 = vmatprep.subr.mxu0 0.0
    %247 = vmatpush1.msra.mxu0 0.0
    %248 = vmatprep.subr.mxu0 0.0
    %249 = vmatpush1.msra.mxu0 0.0
    %250 = vmatprep.subr.mxu0 0.0
    %251 = vmatpush1.msra.mxu0 0.0
    %252 = vmatprep.subr.mxu0 0.0
    %253 = vmatpush1.msra.mxu0 0.0
    %254 = vmatprep.subr.mxu0 0.0
    %255 = vmatpush1.msra.mxu0 0.0
    %256 = vmatprep.subr.mxu0 0.0
    %257 = vmatpush1.msra.mxu0 0.0
    %258 = vmatprep.subr.mxu0 0.0
    %259 = vmatpush1.msra.mxu0 0.0
    %260 = vmatprep.subr.mxu0 0.0
    %261 = vmatpush1.msra.mxu0 0.0
    %262 = vmatprep.subr.mxu0 0.0
    %263 = vmatpush1.msra.mxu0 0.0
    %264 = vmatprep.subr.mxu0 0.0
    %265 = vmatpush1.msra.mxu0 0.0
    %266 = vmatprep.subr.mxu0 0.0
    %267 = vmatpush1.msra.mxu0 0.0
    %268 = vmatprep.subr.mxu0 0.0
    %269 = vmatpush1.msra.mxu0 0.0
    %270 = vmatprep.subr.mxu0 0.0
    %271 = vmatpush1.msra.mxu0 0.0
    %272 = vmatprep.subr.mxu0 0.0
    %273 = vmatpush1.msra.mxu0 0.0
    %274 = vmatprep.subr.mxu0 0.0
    %275 = vmatpush1.msra.mxu0 0.0
    %276 = vmatprep.subr.mxu0 0.0
    %277 = vmatpush1.msra.mxu0 0.0
    %278 = vmatprep.subr.mxu0 0.0
    %279 = vmatpush1.msra.mxu0 0.0
    %280 = vmatprep.subr.mxu0 0.0
    %281 = vmatpush1.msra.mxu0 0.0
    %282 = vmatprep.mubr.f32.mxu0 0.0
    %283 = vmatmul.mubr.f32.gmra.mrb[0].mxu0 %v212
    %v284 = vpop.f32.mrb[0].mxu0
    %v285 = vadd.f32 0.0, %v284
    %v286 = vpop.f32.mrb[0].mxu0
    %287 = vdwg.mxu0
    %v288 = vadd.f32 %v207, %v285
    %289 = vst [vmem:[#allocation2] sm:$0xff] %v288
    %v290 = vld [vmem:[#allocation3] sm:$0xff]
    %v291 = vsel %vm210, %v209, 0.0
    %292 = vadd.xlane.f32.xlu0 %v291
    %v293 = vpop.xlane.xlu0 %292
    %v294 = vadd.f32 %v290, %v293
    %vm295 = vcmask 7168
    %296 = vst.msk [vmem:[#allocation3] sm:$0xff] %vm295, %v294
    // Predicated region
    $region42: #{tpu_custom_call.1} parent=1 // pred_check
      %p297 = pneg %p85
    $region43: #{tpu_custom_call.1} parent=1 // pred_check_branch
      %299 = sbr.rel (%p297) target = $region45
    $region44: #{tpu_custom_call.1} parent=1 // pred_region
      %v300 = vld [vmem:[#allocation2] sm:$0xff]
      %v301 = vld [vmem:[#allocation9] sm:$0xff]
      %v302 = vld [vmem:[#allocation9 + $0x8] sm:$0xff]
      %v303 = vld [vmem:[#allocation9 + $0x10] sm:$0xff]
      %v304 = vld [vmem:[#allocation9 + $0x18] sm:$0xff]
      %v305 = vld [vmem:[#allocation9 + $0x20] sm:$0xff]
      %v306 = vld [vmem:[#allocation9 + $0x28] sm:$0xff]
      %v307 = vld [vmem:[#allocation9 + $0x30] sm:$0xff]
      %v308 = vld [vmem:[#allocation9 + $0x38] sm:$0xff]
      %v309 = vld [vmem:[#allocation9 + $0x40] sm:$0xff]
      %v310 = vld [vmem:[#allocation9 + $0x48] sm:$0xff]
      %v311 = vld [vmem:[#allocation9 + $0x50] sm:$0xff]
      %v312 = vld [vmem:[#allocation9 + $0x58] sm:$0xff]
      %v313 = vld [vmem:[#allocation9 + $0x60] sm:$0xff]
      %v314 = vld [vmem:[#allocation9 + $0x68] sm:$0xff]
      %v315 = vld [vmem:[#allocation9 + $0x70] sm:$0xff]
      %v316 = vld [vmem:[#allocation9 + $0x78] sm:$0xff]
      %v317 = vld [vmem:[#allocation3] sm:$0xff]
      %v318 = vld [vmem:[%s4] sm:$0x1]
      %320 = vset.pattern.permute.xlu0 0
      %321 = vperm.xlu0 %320, %v317
      %v322 = vpop.permute.xlu0 %321
      %v325 = vlaneseq
      %v326 = vshrl.u32 %v325, 7
      %v327 = vsub.s32 0, %v326
      %v328 = vrot.slane %v318, %v327
      %v330 = vmul.f32 %v322, %v328
      %331 = vmatprep.subr.mxu0 0.0
      %332 = vmatpush1.msra.mxu0 %v301
      %333 = vmatprep.subr.mxu0 0.0
      %334 = vmatpush1.msra.mxu0 %v302
      %335 = vmatprep.subr.mxu0 0.0
      %336 = vmatpush1.msra.mxu0 %v303
      %337 = vmatprep.subr.mxu0 0.0
      %338 = vmatpush1.msra.mxu0 %v304
      %339 = vmatprep.subr.mxu0 0.0
      %340 = vmatpush1.msra.mxu0 %v305
      %341 = vmatprep.subr.mxu0 0.0
      %342 = vmatpush1.msra.mxu0 %v306
      %343 = vmatprep.subr.mxu0 0.0
      %344 = vmatpush1.msra.mxu0 %v307
      %345 = vmatprep.subr.mxu0 0.0
      %346 = vmatpush1.msra.mxu0 %v308
      %347 = vmatprep.subr.mxu0 0.0
      %348 = vmatpush1.msra.mxu0 %v309
      %349 = vmatprep.subr.mxu0 0.0
      %350 = vmatpush1.msra.mxu0 %v310
      %351 = vmatprep.subr.mxu0 0.0
      %352 = vmatpush1.msra.mxu0 %v311
      %353 = vmatprep.subr.mxu0 0.0
      %354 = vmatpush1.msra.mxu0 %v312
      %355 = vmatprep.subr.mxu0 0.0
      %356 = vmatpush1.msra.mxu0 %v313
      %357 = vmatprep.subr.mxu0 0.0
      %358 = vmatpush1.msra.mxu0 %v314
      %359 = vmatprep.subr.mxu0 0.0
      %360 = vmatpush1.msra.mxu0 %v315
      %361 = vmatprep.subr.mxu0 0.0
      %362 = vmatpush1.msra.mxu0 %v316
      %363 = vmatprep.subr.mxu0 0.0
      %364 = vmatpush1.msra.mxu0 0.0
      %365 = vmatprep.subr.mxu0 0.0
      %366 = vmatpush1.msra.mxu0 0.0
      %367 = vmatprep.subr.mxu0 0.0
      %368 = vmatpush1.msra.mxu0 0.0
      %369 = vmatprep.subr.mxu0 0.0
      %370 = vmatpush1.msra.mxu0 0.0
      %371 = vmatprep.subr.mxu0 0.0
      %372 = vmatpush1.msra.mxu0 0.0
      %373 = vmatprep.subr.mxu0 0.0
      %374 = vmatpush1.msra.mxu0 0.0
      %375 = vmatprep.subr.mxu0 0.0
      %376 = vmatpush1.msra.mxu0 0.0
      %377 = vmatprep.subr.mxu0 0.0
      %378 = vmatpush1.msra.mxu0 0.0
      %379 = vmatprep.subr.mxu0 0.0
      %380 = vmatpush1.msra.mxu0 0.0
      %381 = vmatprep.subr.mxu0 0.0
      %382 = vmatpush1.msra.mxu0 0.0
      %383 = vmatprep.subr.mxu0 0.0
      %384 = vmatpush1.msra.mxu0 0.0
      %385 = vmatprep.subr.mxu0 0.0
      %386 = vmatpush1.msra.mxu0 0.0
      %387 = vmatprep.subr.mxu0 0.0
      %388 = vmatpush1.msra.mxu0 0.0
      %389 = vmatprep.subr.mxu0 0.0
      %390 = vmatpush1.msra.mxu0 0.0
      %391 = vmatprep.subr.mxu0 0.0
      %392 = vmatpush1.msra.mxu0 0.0
      %393 = vmatprep.subr.mxu0 0.0
      %394 = vmatpush1.msra.mxu0 0.0
      %395 = vmatprep.mubr.f32.mxu0 0.0
      %396 = vmatmul.mubr.f32.gmra.mrb[0].mxu0 %v300
      %v397 = vpop.f32.mrb[0].mxu0
      %v398 = vadd.f32 %v330, %v397
      %v399 = vpop.f32.mrb[0].mxu0
      %400 = vdwg.mxu0
      %401 = vst [vmem:[#allocation10] sm:$0xff] %v398
    $region45: #{tpu_custom_call.1} parent=1 // pred_fallthru
      _
    // Predicated region
    $region46: #{tpu_custom_call.1} parent=1 // pred_check
      _
    $region47: #{tpu_custom_call.1} parent=1 // pred_check_branch
      %403 = sbr.rel (0) target = $region49
    $region48: #{tpu_custom_call.1} parent=1 // pred_region
      %s405 = ssub.s32 128, 128
      %406 = vsyncadd [#allocation6], %s405
      %s408 = sshll.u32 [#allocation10], 4
      %s409 = int_to_ptr.vmem [resolvable:$true] %s408
      %411 = dma.vmem_to_hbm [thread:$0]  %s409, 128, %s6, [#allocation6]
    $region49: #{tpu_custom_call.1} parent=1 // pred_fallthru
      _
    // Predicated region
    $region50: #{tpu_custom_call.1} parent=1 // pred_check
      _
    $region51: #{tpu_custom_call.1} parent=1 // pred_check_branch
      %413 = sbr.rel (0) target = $region53
    $region52: #{tpu_custom_call.1} parent=1 // pred_region
      %414 = dma.done [#allocation6], 128
    $region53: #{tpu_custom_call.1} parent=1 // pred_fallthru
      _
    %415 = vsyncpa [#allocation5], 1
    %416 = vsyncpa [#allocation8], 1
    %417 = vsyncpa [#allocation6], 1

// kernel: tpu_custom_call.1
$region0: #{tpu_custom_call.1}
  #allocation0 [shape = 'u32[]', space=smem, size = 0x4, offset = 0x4, fixed_abs, tag = 'smem constant byte address 0x4 - core index']
  #allocation1 [shape = 'u32[144,128]{1,0:T(1,128)}', space=vmem, size = 0x12000, scoped, tag = 'internal scratch']
  #allocation2 [shape = 'f32[8,128]{1,0:T(8,128)}', space=vmem, size = 0x1000, scoped, tag = 'scratch operand']
  #allocation3 [shape = 'f32[8,1]{1,0:T(8,128)}', space=vmem, size = 0x1000, scoped, tag = 'scratch operand']
  %s0 = inlined_call_operand.hbm [shape: f32[20,32], index: 0, kind: input, shape index: {}]
  %s1 = inlined_call_operand.hbm [shape: f32[32,128], index: 1, kind: input, shape index: {}]
  %s2 = inlined_call_operand.vmem [shape: f32[1,128], index: 2, kind: input, shape index: {}]
  %s3 = inlined_call_operand.hbm [shape: f32[128,128], index: 3, kind: input, shape index: {}]
  %s4 = inlined_call_operand.vmem [shape: f32[1,128], index: 4, kind: input, shape index: {}]
  %s5 = inlined_call_operand.vmem [shape: s32[1,20], index: 5, kind: input, shape index: {}]
  %s6 = inlined_call_operand.hbm [shape: f32[1,8,128], index: 6, kind: output, shape index: {}]
  %s7 = sld [smem:[#allocation0]]
  $region54: #{tpu_custom_call.1} parent=0
    _
  %s9 = ssub.s32 1, %s7
  %s10 = scalar_select 0, %s9, %s7
  $region1: #{tpu_custom_call.1} parent=0
    #allocation4 [shape = 'u8[12288]{0}', space=vmem, size = 0x3000, scoped, tag = 'input window, operand 0, single buffered']
    #allocation5 [shape = 's32[1]{0}', space=sflag, size = 0x4, scoped, tag = 'scoped memory for tpu_custom_call.1']
    #allocation6 [shape = 's32[1]{0}', space=sflag, size = 0x4, scoped, tag = 'scoped memory for tpu_custom_call.1']
    #allocation7 [shape = 'u8[16384]{0}', space=vmem, size = 0x4000, scoped, tag = 'input window, operand 1, single buffered']
    #allocation8 [shape = 's32[1]{0}', space=sflag, size = 0x4, scoped, tag = 'scoped memory for tpu_custom_call.1']
    #allocation9 [shape = 'u8[65536]{0}', space=vmem, size = 0x10000, scoped, tag = 'input window, operand 3, single buffered']
    #allocation10 [shape = 'u8[4096]{0}', space=vmem, size = 0x1000, scoped, tag = 'output window, operand 0, single buffered']
    %11 = vsyncpa [#allocation5], 0
    %12 = vsyncpa [#allocation8], 0
    %13 = vsyncpa [#allocation6], 0
    // Predicated region
    $region2: #{tpu_custom_call.1} parent=1 // pred_check
      _
    $region3: #{tpu_custom_call.1} parent=1 // pred_check_branch
      %15 = sbr.rel (0) target = $region5
    $region4: #{tpu_custom_call.1} parent=1 // pred_region
      %s16 = sadd.s32 0, 0
      %s17 = smul.u32 3, %s16
      %s19 = ssub.s32 384, 384
      %20 = vsyncadd [#allocation5], %s19
      %s21 = smul.addr %s17, 128
      %s22 = scalar_lea.hbm %s0, %s21
      %s23 = sshll.u32 [#allocation4], 4
      %s24 = int_to_ptr.vmem [resolvable:$true] %s23
      %29 = dma.hbm_to_vmem [thread:$0]  %s22, 384, %s24, [#allocation5], 128, 128, 8
    $region5: #{tpu_custom_call.1} parent=1 // pred_fallthru
      _
    // Predicated region
    $region6: #{tpu_custom_call.1} parent=1 // pred_check
      _
    $region7: #{tpu_custom_call.1} parent=1 // pred_check_branch
      %31 = sbr.rel (0) target = $region9
    $region8: #{tpu_custom_call.1} parent=1 // pred_region
      %s33 = ssub.s32 512, 512
      %34 = vsyncadd [#allocation8], %s33
      %s35 = sshll.u32 [#allocation7], 4
      %s36 = int_to_ptr.vmem [resolvable:$true] %s35
      %41 = dma.hbm_to_vmem [thread:$0]  %s1, 512, %s36, [#allocation8], 128, 128, 8
    $region9: #{tpu_custom_call.1} parent=1 // pred_fallthru
      _
    // Predicated region
    $region10: #{tpu_custom_call.1} parent=1 // pred_check
      _
    $region11: #{tpu_custom_call.1} parent=1 // pred_check_branch
      %43 = sbr.rel (0) target = $region13
    $region12: #{tpu_custom_call.1} parent=1 // pred_region
      _
    $region13: #{tpu_custom_call.1} parent=1 // pred_fallthru
      _
    // Predicated region
    $region14: #{tpu_custom_call.1} parent=1 // pred_check
      _
    $region15: #{tpu_custom_call.1} parent=1 // pred_check_branch
      %45 = sbr.rel (0) target = $region17
    $region16: #{tpu_custom_call.1} parent=1 // pred_region
      %s47 = ssub.s32 2048, 2048
      %48 = vsyncadd [#allocation8], %s47
      %s49 = sshll.u32 [#allocation9], 4
      %s50 = int_to_ptr.vmem [resolvable:$true] %s49
      %55 = dma.hbm_to_vmem [thread:$0]  %s3, 2048, %s50, [#allocation8], 128, 128, 8
    $region17: #{tpu_custom_call.1} parent=1 // pred_fallthru
      _
    // Predicated region
    $region18: #{tpu_custom_call.1} parent=1 // pred_check
      _
    $region19: #{tpu_custom_call.1} parent=1 // pred_check_branch
      %57 = sbr.rel (0) target = $region21
    $region20: #{tpu_custom_call.1} parent=1 // pred_region
      _
    $region21: #{tpu_custom_call.1} parent=1 // pred_fallthru
      _
    // Predicated region
    $region22: #{tpu_custom_call.1} parent=1 // pred_check
      _
    $region23: #{tpu_custom_call.1} parent=1 // pred_check_branch
      %59 = sbr.rel (0) target = $region25
    $region24: #{tpu_custom_call.1} parent=1 // pred_region
      %s60 = sadd.s32 0, 0
      %p61 = scmp.lt.s32.totalorder %s60, 0
      %s62 = scalar_select %p61, %s60, 0
      %s63 = scalar_lea.vmem %s5, %s62
      %s64 = sadd.s32 0, 0
    $region25: #{tpu_custom_call.1} parent=1 // pred_fallthru
      _
    // Predicated region
    $region26: #{tpu_custom_call.1} parent=1 // pred_check
      _
    $region27: #{tpu_custom_call.1} parent=1 // pred_check_branch
      %66 = sbr.rel (0) target = $region29
    $region28: #{tpu_custom_call.1} parent=1 // pred_region
      %67 = dma.done [#allocation5], 384
    $region29: #{tpu_custom_call.1} parent=1 // pred_fallthru
      _
    // Predicated region
    $region30: #{tpu_custom_call.1} parent=1 // pred_check
      _
    $region31: #{tpu_custom_call.1} parent=1 // pred_check_branch
      %69 = sbr.rel (0) target = $region33
    $region32: #{tpu_custom_call.1} parent=1 // pred_region
      %70 = dma.done [#allocation8], 512
    $region33: #{tpu_custom_call.1} parent=1 // pred_fallthru
      _
    // Predicated region
    $region34: #{tpu_custom_call.1} parent=1 // pred_check
      _
    $region35: #{tpu_custom_call.1} parent=1 // pred_check_branch
      %72 = sbr.rel (0) target = $region37
    $region36: #{tpu_custom_call.1} parent=1 // pred_region
      %73 = dma.done [#allocation8], 2048
    $region37: #{tpu_custom_call.1} parent=1 // pred_fallthru
      _
    %s74 = sadd.s32 0, 0
    %p75 = scmp.lt.s32.totalorder %s74, 0
    %s76 = scalar_select %p75, %s74, 0
    %s77 = scalar_lea.vmem %s5, %s76
    %s78 = sadd.s32 0, 0
    %s79 = smul.u32 3, %s78
    %s80 = sadd.s32 0, 0
    %p81 = scmp.lt.s32.totalorder %s80, 0
    %s82 = scalar_select %p81, %s80, 0
    %s83 = scalar_lea.vmem %s5, %s82
    %s84 = sadd.s32 0, 0
    %p85 = scmp.eq.s32.totalorder 0, 0
    // Predicated region
    $region38: #{tpu_custom_call.1} parent=1 // pred_check
      %p86 = pneg %p85
    $region39: #{tpu_custom_call.1} parent=1 // pred_check_branch
      %88 = sbr.rel (%p86) target = $region41
    $region40: #{tpu_custom_call.1} parent=1 // pred_region
      %89 = vst [vmem:[#allocation2] sm:$0xff] 0.0
      %vm90 = vcmask 7168
      %91 = vst.msk [vmem:[#allocation3] sm:$0xff] %vm90, 0.0
    $region41: #{tpu_custom_call.1} parent=1 // pred_fallthru
      _
    %v92 = vld [vmem:[#allocation4] sm:$0xff]
    %v93 = vld [vmem:[#allocation4 + $0x8] sm:$0xff]
    %v94 = vld [vmem:[#allocation4 + $0x10] sm:$0xf]
    %v95 = vld [vmem:[#allocation7] sm:$0xff]
    %v96 = vld [vmem:[#allocation7 + $0x8] sm:$0xff]
    %v97 = vld [vmem:[#allocation7 + $0x10] sm:$0xff]
    %v98 = vld [vmem:[#allocation7 + $0x18] sm:$0xff]
    %v99 = vld [vmem:[%s2] sm:$0x1]
    %v101 = vlaneseq
    %v102 = vshrl.u32 %v101, 7
    %v103 = vsub.s32 0, %v102
    %v104 = vrot.slane %v99, %v103
    %vm106 = vcmask 261120
    %v108 = vsel %vm106, %v92, 0
    %v111 = vsel %vm106, %v93, 0
    %v114 = vsel %vm106, %v94, 0
    %116 = vmatprep.subr.mxu0 0.0
    %117 = vmatpush1.msra.mxu0 %v95
    %118 = vmatprep.subr.mxu0 0.0
    %119 = vmatpush1.msra.mxu0 %v96
    %120 = vmatprep.subr.mxu0 0.0
    %121 = vmatpush1.msra.mxu0 %v97
    %122 = vmatprep.subr.mxu0 0.0
    %123 = vmatpush1.msra.mxu0 %v98
    %124 = vmatprep.subr.mxu0 0.0
    %125 = vmatpush1.msra.mxu0 0.0
    %126 = vmatprep.subr.mxu0 0.0
    %127 = vmatpush1.msra.mxu0 0.0
    %128 = vmatprep.subr.mxu0 0.0
    %129 = vmatpush1.msra.mxu0 0.0
    %130 = vmatprep.subr.mxu0 0.0
    %131 = vmatpush1.msra.mxu0 0.0
    %132 = vmatprep.subr.mxu0 0.0
    %133 = vmatpush1.msra.mxu0 0.0
    %134 = vmatprep.subr.mxu0 0.0
    %135 = vmatpush1.msra.mxu0 0.0
    %136 = vmatprep.subr.mxu0 0.0
    %137 = vmatpush1.msra.mxu0 0.0
    %138 = vmatprep.subr.mxu0 0.0
    %139 = vmatpush1.msra.mxu0 0.0
    %140 = vmatprep.subr.mxu0 0.0
    %141 = vmatpush1.msra.mxu0 0.0
    %142 = vmatprep.subr.mxu0 0.0
    %143 = vmatpush1.msra.mxu0 0.0
    %144 = vmatprep.subr.mxu0 0.0
    %145 = vmatpush1.msra.mxu0 0.0
    %146 = vmatprep.subr.mxu0 0.0
    %147 = vmatpush1.msra.mxu0 0.0
    %148 = vmatprep.subr.mxu0 0.0
    %149 = vmatpush1.msra.mxu0 0.0
    %150 = vmatprep.subr.mxu0 0.0
    %151 = vmatpush1.msra.mxu0 0.0
    %152 = vmatprep.subr.mxu0 0.0
    %153 = vmatpush1.msra.mxu0 0.0
    %154 = vmatprep.subr.mxu0 0.0
    %155 = vmatpush1.msra.mxu0 0.0
    %156 = vmatprep.subr.mxu0 0.0
    %157 = vmatpush1.msra.mxu0 0.0
    %158 = vmatprep.subr.mxu0 0.0
    %159 = vmatpush1.msra.mxu0 0.0
    %160 = vmatprep.subr.mxu0 0.0
    %161 = vmatpush1.msra.mxu0 0.0
    %162 = vmatprep.subr.mxu0 0.0
    %163 = vmatpush1.msra.mxu0 0.0
    %164 = vmatprep.subr.mxu0 0.0
    %165 = vmatpush1.msra.mxu0 0.0
    %166 = vmatprep.subr.mxu0 0.0
    %167 = vmatpush1.msra.mxu0 0.0
    %168 = vmatprep.subr.mxu0 0.0
    %169 = vmatpush1.msra.mxu0 0.0
    %170 = vmatprep.subr.mxu0 0.0
    %171 = vmatpush1.msra.mxu0 0.0
    %172 = vmatprep.subr.mxu0 0.0
    %173 = vmatpush1.msra.mxu0 0.0
    %174 = vmatprep.subr.mxu0 0.0
    %175 = vmatpush1.msra.mxu0 0.0
    %176 = vmatprep.subr.mxu0 0.0
    %177 = vmatpush1.msra.mxu0 0.0
    %178 = vmatprep.subr.mxu0 0.0
    %179 = vmatpush1.msra.mxu0 0.0
    %180 = vmatprep.mubr.f32.mxu0 0.0
    %181 = vmatmul.mubr.f32.gmra.mrb[0].mxu0 %v108
    %v182 = vpop.f32.mrb[0].mxu0
    %v183 = vadd.f32 %v104, %v182
    %v184 = vpop.f32.mrb[0].mxu0
    %185 = vmatprep.mubr.f32.mxu0 0.0
    %186 = vmatmul.mubr.f32.gmra.mrb[0].mxu0 %v111
    %v187 = vpop.f32.mrb[0].mxu0
    %v188 = vadd.f32 %v104, %v187
    %v189 = vpop.f32.mrb[0].mxu0
    %190 = vmatprep.mubr.f32.mxu0 0.0
    %191 = vmatmul.mubr.f32.gmra.mrb[0].mxu0 %v114
    %v192 = vpop.f32.mrb[0].mxu0
    %v193 = vadd.f32 %v104, %v192
    %v194 = vpop.f32.mrb[0].mxu0
    %195 = vdwg.mxu0
    %v196 = vmax.f32 %v183, 0.0
    %v197 = vmax.f32 %v188, 0.0
    %v198 = vmax.f32 %v193, 0.0
    %v199 = vld [vmem:[%s83] sm:$0x1]
    %v200 = vlaneseq
    %v201 = vshrl.u32 %v200, 7
    %v202 = vlaneseq
    %v203 = vshrl.u32 %v202, 7
    %v204 = vsub.s32 0, %v203
    %v205 = vrot.slane %v199, %v204
    %vm206 = vcmp.eq.s32.totalorder %v205, %v201
    %v207 = vld [vmem:[#allocation2] sm:$0xff]
    %v208 = vsel %vm206, 1, 0
    %v209 = vcvt.s32.f32 %v208
    %vm210 = vcmask 162816
    %v212 = vsel %vm210, %v209, 0
    %vm214 = vcmask 1043456
    %v216 = vsel %vm214, %v198, 0
    %218 = vmatprep.subr.mxu0 0.0
    %219 = vmatpush1.msra.mxu0 %v196
    %220 = vmatprep.subr.mxu0 0.0
    %221 = vmatpush1.msra.mxu0 %v197
    %222 = vmatprep.subr.mxu0 0.0
    %223 = vmatpush1.msra.mxu0 %v216
    %224 = vmatprep.subr.mxu0 0.0
    %225 = vmatpush1.msra.mxu0 0.0
    %226 = vmatprep.subr.mxu0 0.0
    %227 = vmatpush1.msra.mxu0 0.0
    %228 = vmatprep.subr.mxu0 0.0
    %229 = vmatpush1.msra.mxu0 0.0
    %230 = vmatprep.subr.mxu0 0.0
    %231 = vmatpush1.msra.mxu0 0.0
    %232 = vmatprep.subr.mxu0 0.0
    %233 = vmatpush1.msra.mxu0 0.0
    %234 = vmatprep.subr.mxu0 0.0
    %235 = vmatpush1.msra.mxu0 0.0
    %236 = vmatprep.subr.mxu0 0.0
    %237 = vmatpush1.msra.mxu0 0.0
    %238 = vmatprep.subr.mxu0 0.0
    %239 = vmatpush1.msra.mxu0 0.0
    %240 = vmatprep.subr.mxu0 0.0
    %241 = vmatpush1.msra.mxu0 0.0
    %242 = vmatprep.subr.mxu0 0.0
    %243 = vmatpush1.msra.mxu0 0.0
    %244 = vmatprep.subr.mxu0 0.0
    %245 = vmatpush1.msra.mxu0 0.0
    %246 = vmatprep.subr.mxu0 0.0
    %247 = vmatpush1.msra.mxu0 0.0
    %248 = vmatprep.subr.mxu0 0.0
    %249 = vmatpush1.msra.mxu0 0.0
    %250 = vmatprep.subr.mxu0 0.0
    %251 = vmatpush1.msra.mxu0 0.0
    %252 = vmatprep.subr.mxu0 0.0
    %253 = vmatpush1.msra.mxu0 0.0
    %254 = vmatprep.subr.mxu0 0.0
    %255 = vmatpush1.msra.mxu0 0.0
    %256 = vmatprep.subr.mxu0 0.0
    %257 = vmatpush1.msra.mxu0 0.0
    %258 = vmatprep.subr.mxu0 0.0
    %259 = vmatpush1.msra.mxu0 0.0
    %260 = vmatprep.subr.mxu0 0.0
    %261 = vmatpush1.msra.mxu0 0.0
    %262 = vmatprep.subr.mxu0 0.0
    %263 = vmatpush1.msra.mxu0 0.0
    %264 = vmatprep.subr.mxu0 0.0
    %265 = vmatpush1.msra.mxu0 0.0
    %266 = vmatprep.subr.mxu0 0.0
    %267 = vmatpush1.msra.mxu0 0.0
    %268 = vmatprep.subr.mxu0 0.0
    %269 = vmatpush1.msra.mxu0 0.0
    %270 = vmatprep.subr.mxu0 0.0
    %271 = vmatpush1.msra.mxu0 0.0
    %272 = vmatprep.subr.mxu0 0.0
    %273 = vmatpush1.msra.mxu0 0.0
    %274 = vmatprep.subr.mxu0 0.0
    %275 = vmatpush1.msra.mxu0 0.0
    %276 = vmatprep.subr.mxu0 0.0
    %277 = vmatpush1.msra.mxu0 0.0
    %278 = vmatprep.subr.mxu0 0.0
    %279 = vmatpush1.msra.mxu0 0.0
    %280 = vmatprep.subr.mxu0 0.0
    %281 = vmatpush1.msra.mxu0 0.0
    %282 = vmatprep.mubr.f32.mxu0 0.0
    %283 = vmatmul.mubr.f32.gmra.mrb[0].mxu0 %v212
    %v284 = vpop.f32.mrb[0].mxu0
    %v285 = vadd.f32 0.0, %v284
    %v286 = vpop.f32.mrb[0].mxu0
    %287 = vdwg.mxu0
    %v288 = vadd.f32 %v207, %v285
    %289 = vst [vmem:[#allocation2] sm:$0xff] %v288
    %v290 = vld [vmem:[#allocation3] sm:$0xff]
    %v291 = vsel %vm210, %v209, 0.0
    %292 = vadd.xlane.f32.xlu0 %v291
    %v293 = vpop.xlane.xlu0 %292
    %v294 = vadd.f32 %v290, %v293
    %vm295 = vcmask 7168
    %296 = vst.msk [vmem:[#allocation3] sm:$0xff] %vm295, %v294
    // Predicated region
    $region42: #{tpu_custom_call.1} parent=1 // pred_check
      %p297 = pneg %p85
    $region43: #{tpu_custom_call.1} parent=1 // pred_check_branch
      %299 = sbr.rel (%p297) target = $region45
    $region44: #{tpu_custom_call.1} parent=1 // pred_region
      %v300 = vld [vmem:[#allocation2] sm:$0xff]
      %v301 = vld [vmem:[#allocation9] sm:$0xff]
      %v302 = vld [vmem:[#allocation9 + $0x8] sm:$0xff]
      %v303 = vld [vmem:[#allocation9 + $0x10] sm:$0xff]
      %v304 = vld [vmem:[#allocation9 + $0x18] sm:$0xff]
      %v305 = vld [vmem:[#allocation9 + $0x20] sm:$0xff]
      %v306 = vld [vmem:[#allocation9 + $0x28] sm:$0xff]
      %v307 = vld [vmem:[#allocation9 + $0x30] sm:$0xff]
      %v308 = vld [vmem:[#allocation9 + $0x38] sm:$0xff]
      %v309 = vld [vmem:[#allocation9 + $0x40] sm:$0xff]
      %v310 = vld [vmem:[#allocation9 + $0x48] sm:$0xff]
      %v311 = vld [vmem:[#allocation9 + $0x50] sm:$0xff]
      %v312 = vld [vmem:[#allocation9 + $0x58] sm:$0xff]
      %v313 = vld [vmem:[#allocation9 + $0x60] sm:$0xff]
      %v314 = vld [vmem:[#allocation9 + $0x68] sm:$0xff]
      %v315 = vld [vmem:[#allocation9 + $0x70] sm:$0xff]
      %v316 = vld [vmem:[#allocation9 + $0x78] sm:$0xff]
      %v317 = vld [vmem:[#allocation3] sm:$0xff]
      %v318 = vld [vmem:[%s4] sm:$0x1]
      %320 = vset.pattern.permute.xlu0 0
      %321 = vperm.xlu0 %320, %v317
      %v322 = vpop.permute.xlu0 %321
      %v325 = vlaneseq
      %v326 = vshrl.u32 %v325, 7
      %v327 = vsub.s32 0, %v326
      %v328 = vrot.slane %v318, %v327
      %v330 = vmul.f32 %v322, %v328
      %331 = vmatprep.subr.mxu0 0.0
      %332 = vmatpush1.msra.mxu0 %v301
      %333 = vmatprep.subr.mxu0 0.0
      %334 = vmatpush1.msra.mxu0 %v302
      %335 = vmatprep.subr.mxu0 0.0
      %336 = vmatpush1.msra.mxu0 %v303
      %337 = vmatprep.subr.mxu0 0.0
      %338 = vmatpush1.msra.mxu0 %v304
      %339 = vmatprep.subr.mxu0 0.0
      %340 = vmatpush1.msra.mxu0 %v305
      %341 = vmatprep.subr.mxu0 0.0
      %342 = vmatpush1.msra.mxu0 %v306
      %343 = vmatprep.subr.mxu0 0.0
      %344 = vmatpush1.msra.mxu0 %v307
      %345 = vmatprep.subr.mxu0 0.0
      %346 = vmatpush1.msra.mxu0 %v308
      %347 = vmatprep.subr.mxu0 0.0
      %348 = vmatpush1.msra.mxu0 %v309
      %349 = vmatprep.subr.mxu0 0.0
      %350 = vmatpush1.msra.mxu0 %v310
      %351 = vmatprep.subr.mxu0 0.0
      %352 = vmatpush1.msra.mxu0 %v311
      %353 = vmatprep.subr.mxu0 0.0
      %354 = vmatpush1.msra.mxu0 %v312
      %355 = vmatprep.subr.mxu0 0.0
      %356 = vmatpush1.msra.mxu0 %v313
      %357 = vmatprep.subr.mxu0 0.0
      %358 = vmatpush1.msra.mxu0 %v314
      %359 = vmatprep.subr.mxu0 0.0
      %360 = vmatpush1.msra.mxu0 %v315
      %361 = vmatprep.subr.mxu0 0.0
      %362 = vmatpush1.msra.mxu0 %v316
      %363 = vmatprep.subr.mxu0 0.0
      %364 = vmatpush1.msra.mxu0 0.0
      %365 = vmatprep.subr.mxu0 0.0
      %366 = vmatpush1.msra.mxu0 0.0
      %367 = vmatprep.subr.mxu0 0.0
      %368 = vmatpush1.msra.mxu0 0.0
      %369 = vmatprep.subr.mxu0 0.0
      %370 = vmatpush1.msra.mxu0 0.0
      %371 = vmatprep.subr.mxu0 0.0
      %372 = vmatpush1.msra.mxu0 0.0
      %373 = vmatprep.subr.mxu0 0.0
      %374 = vmatpush1.msra.mxu0 0.0
      %375 = vmatprep.subr.mxu0 0.0
      %376 = vmatpush1.msra.mxu0 0.0
      %377 = vmatprep.subr.mxu0 0.0
      %378 = vmatpush1.msra.mxu0 0.0
      %379 = vmatprep.subr.mxu0 0.0
      %380 = vmatpush1.msra.mxu0 0.0
      %381 = vmatprep.subr.mxu0 0.0
      %382 = vmatpush1.msra.mxu0 0.0
      %383 = vmatprep.subr.mxu0 0.0
      %384 = vmatpush1.msra.mxu0 0.0
      %385 = vmatprep.subr.mxu0 0.0
      %386 = vmatpush1.msra.mxu0 0.0
      %387 = vmatprep.subr.mxu0 0.0
      %388 = vmatpush1.msra.mxu0 0.0
      %389 = vmatprep.subr.mxu0 0.0
      %390 = vmatpush1.msra.mxu0 0.0
      %391 = vmatprep.subr.mxu0 0.0
      %392 = vmatpush1.msra.mxu0 0.0
      %393 = vmatprep.subr.mxu0 0.0
      %394 = vmatpush1.msra.mxu0 0.0
      %395 = vmatprep.mubr.f32.mxu0 0.0
      %396 = vmatmul.mubr.f32.gmra.mrb[0].mxu0 %v300
      %v397 = vpop.f32.mrb[0].mxu0
      %v398 = vadd.f32 %v330, %v397
      %v399 = vpop.f32.mrb[0].mxu0
      %400 = vdwg.mxu0
      %401 = vst [vmem:[#allocation10] sm:$0xff] %v398
    $region45: #{tpu_custom_call.1} parent=1 // pred_fallthru
      _
    // Predicated region
    $region46: #{tpu_custom_call.1} parent=1 // pred_check
      _
    $region47: #{tpu_custom_call.1} parent=1 // pred_check_branch
      %403 = sbr.rel (0) target = $region49
    $region48: #{tpu_custom_call.1} parent=1 // pred_region
      %s405 = ssub.s32 128, 128
      %406 = vsyncadd [#allocation6], %s405
      %s408 = sshll.u32 [#allocation10], 4
      %s409 = int_to_ptr.vmem [resolvable:$true] %s408
      %411 = dma.vmem_to_hbm [thread:$0]  %s409, 128, %s6, [#allocation6]
    $region49: #{tpu_custom_call.1} parent=1 // pred_fallthru
      _
    // Predicated region
    $region50: #{tpu_custom_call.1} parent=1 // pred_check
      _
    $region51: #{tpu_custom_call.1} parent=1 // pred_check_branch
      %413 = sbr.rel (0) target = $region53
    $region52: #{tpu_custom_call.1} parent=1 // pred_region
      %414 = dma.done [#allocation6], 128
    $region53: #{tpu_custom_call.1} parent=1 // pred_fallthru
      _
    %415 = vsyncpa [#allocation5], 1
    %416 = vsyncpa [#allocation8], 1
    %417 = vsyncpa [#allocation6], 1

</llo_original>
